<compile_context>
chip_gen: v6e
topology: v6e:2x2x1
jax: 0.10.0
libtpu: 0.0.40
codegen_flags: <defaults>
</compile_context>

<pallas_src>
import jax
import jax.numpy as jnp
import numpy as np
from jax.experimental import pallas as pl
from jax.experimental.pallas import tpu as pltpu

# ---------------- FLAGS (synthetic, matching FLAGS.hidden1 / FLAGS.hidden2) ---
HIDDEN1 = 32
HIDDEN2 = 16
COMPUTE_DTYPE = jnp.bfloat16   # MXU operand dtype; accumulation stays f32.


# ------------------------------ helpers ---------------------------------------
def _pick_row_tile(n, target=256):
    """Largest row-tile <= target that divides N (multiple of 8), else whole N."""
    if n <= target:
        return n
    for tm in range(target, 7, -8):
        if n % tm == 0:
            return tm
    return n


def _vmem_budget_bytes(n, f, h1, h2, tm, t, itemsize):
    """Size the scoped-VMEM limit from the actual buffers instead of hardcoding."""
    dbl = 2  # Pallas double-buffers pipelined inputs.
    adj = 2 * dbl * tm * n * itemsize                               # two adjacency row tiles
    small_in = dbl * (n * f + 2 * f * h1 + 2 * h1 * h2) * itemsize  # X + stacked weights
    out = 2 * h2 * 4
    scratch = (2 * n * h1 + t * tm * h1 + 2 * n * h2) * itemsize + h2 * 4
    total = int((adj + small_in + out + scratch) * 1.5) + (2 << 20)  # compiler headroom
    return max(min(total, 64 * 1024 * 1024), 4 * 1024 * 1024)


# ------------------------------ Pallas kernel ---------------------------------
def _rgcn_fused_kernel(x_ref, a1_ref, a2_ref, w1_ref, w2_ref, o_ref,
                       xw_s, h1_s, hw_s, acc_s):
    """Fused layer1 -> layer2 -> row-mean.

    Grid = (phase, row_tile):
      phase 0: hidden1 rows for this adjacency row tile -> h1 scratch
      phase 1: hidden2 rows for this row tile -> running column sum (for mean)

    x_ref  : (N, F)        node features                 (bf16)
    a1_ref : (TM, N)       adjacency row tile, relation 1 (bf16)
    a2_ref : (TM, N)       adjacency row tile, relation 2 (bf16)
    w1_ref : (2, F, H1)    stacked layer-1 weights        (bf16)
    w2_ref : (2, H1, H2)   stacked layer-2 weights        (bf16)
    o_ref  : (1, H2)       mean over nodes of hidden2     (f32)
    xw_s   : (2, N, H1)    X @ W1_r per relation          (bf16 scratch)
    h1_s   : (T, TM, H1)   hidden1 rows                   (bf16 scratch)
    hw_s   : (2, N, H2)    hidden1 @ W2_r per relation    (bf16 scratch)
    acc_s  : (1, H2)       running column sum of hidden2  (f32 scratch)
    """
    phase = pl.program_id(0)
    i = pl.program_id(1)
    n_tiles = pl.num_programs(1)
    n_nodes = x_ref.shape[0]
    h1 = h1_s.shape[-1]

    a1 = a1_ref[...]
    a2 = a2_ref[...]

    # ---- phase 0, first tile: feature transform X @ W1_r (done once) ---------
    @pl.when((phase == 0) & (i == 0))
    def _():
        x = x_ref[...]
        xw_s[0] = jnp.dot(x, w1_ref[0],
                          preferred_element_type=jnp.float32).astype(xw_s.dtype)
        xw_s[1] = jnp.dot(x, w1_ref[1],
                          preferred_element_type=jnp.float32).astype(xw_s.dtype)

    # ---- phase 0: layer-1 aggregation for this row tile -----------------------
    @pl.when(phase == 0)
    def _():
        h1_rows = jnp.maximum(
            jnp.dot(a1, xw_s[0], preferred_element_type=jnp.float32)
            + jnp.dot(a2, xw_s[1], preferred_element_type=jnp.float32), 0.0)
        h1_s[i] = h1_rows.astype(h1_s.dtype)

    # ---- phase 1, first tile: hidden transform h1 @ W2_r (done once) ----------
    @pl.when((phase == 1) & (i == 0))
    def _():
        h1_full = h1_s[...].reshape(n_nodes, h1)
        hw_s[0] = jnp.dot(h1_full, w2_ref[0],
                          preferred_element_type=jnp.float32).astype(hw_s.dtype)
        hw_s[1] = jnp.dot(h1_full, w2_ref[1],
                          preferred_element_type=jnp.float32).astype(hw_s.dtype)
        acc_s[...] = jnp.zeros_like(acc_s)

    # ---- phase 1: layer-2 aggregation + running sum for the mean --------------
    @pl.when(phase == 1)
    def _():
        h2_rows = jnp.maximum(
            jnp.dot(a1, hw_s[0], preferred_element_type=jnp.float32)
            + jnp.dot(a2, hw_s[1], preferred_element_type=jnp.float32), 0.0)
        acc_s[...] += jnp.sum(h2_rows, axis=0, keepdims=True)

    # ---- finalize: mean over all N rows ---------------------------------------
    @pl.when((phase == 1) & (i == n_tiles - 1))
    def _():
        o_ref[...] = (acc_s[...] * (1.0 / n_nodes)).astype(o_ref.dtype)


# ------------------------------ wrappers ---------------------------------------
def prepare_params(params, dtype=COMPUTE_DTYPE):
    """One-time weight prep (stacking + dtype cast), hoisted out of the call path."""
    return {
        "w1": jnp.stack([params["w1_r1"], params["w1_r2"]]).astype(dtype),  # (2, F, H1)
        "w2": jnp.stack([params["w2_r1"], params["w2_r2"]]).astype(dtype),  # (2, H1, H2)
    }


def rgcn_forward(inputs, adj_1, adj_2, prepared, dropout=0.0):
    if dropout != 0.0:
        # TODO(synk): sparse-dropout path (features_nonzero) not implemented.
        raise NotImplementedError("dropout > 0 is not supported in the Pallas kernel")

    n, f = inputs.shape
    _, _, h1 = prepared["w1"].shape
    _, _, h2 = prepared["w2"].shape
    cdt = prepared["w1"].dtype

    # Only cast if the caller did not already store the operands in the compute
    # dtype (keeps the per-call hot path free of extra HBM round-trips).
    inputs = inputs if inputs.dtype == cdt else inputs.astype(cdt)
    adj_1 = adj_1 if adj_1.dtype == cdt else adj_1.astype(cdt)
    adj_2 = adj_2 if adj_2.dtype == cdt else adj_2.astype(cdt)

    tm = _pick_row_tile(n)
    t = n // tm
    itemsize = jnp.dtype(cdt).itemsize

    out = pl.pallas_call(
        _rgcn_fused_kernel,
        out_shape=jax.ShapeDtypeStruct((1, h2), jnp.float32),
        grid=(2, t),
        in_specs=[
            pl.BlockSpec((n, f), lambda p, i: (0, 0)),          # X (resident)
            pl.BlockSpec((tm, n), lambda p, i: (i, 0)),         # adj_1 row tile
            pl.BlockSpec((tm, n), lambda p, i: (i, 0)),         # adj_2 row tile
            pl.BlockSpec((2, f, h1), lambda p, i: (0, 0, 0)),   # W1 (resident)
            pl.BlockSpec((2, h1, h2), lambda p, i: (0, 0, 0)),  # W2 (resident)
        ],
        out_specs=pl.BlockSpec((1, h2), lambda p, i: (0, 0)),
        scratch_shapes=[
            pltpu.VMEM((2, n, h1), cdt),       # X @ W1_r
            pltpu.VMEM((t, tm, h1), cdt),      # hidden1
            pltpu.VMEM((2, n, h2), cdt),       # hidden1 @ W2_r
            pltpu.VMEM((1, h2), jnp.float32),  # mean accumulator
        ],
        compiler_params=pltpu.CompilerParams(
            # Both axes sequential: phase 1 consumes phase-0 scratch, row tiles
            # share the mean accumulator.
            dimension_semantics=("arbitrary", "arbitrary"),
            vmem_limit_bytes=_vmem_budget_bytes(n, f, h1, h2, tm, t, itemsize),
        ),
    )(inputs, adj_1, adj_2, prepared["w1"], prepared["w2"])
    return out


def init_params(key, num_features, hidden1, hidden2):
    """Glorot-uniform init (matches weight_variable_glorot)."""
    def glorot(k, fan_in, fan_out):
        r = np.sqrt(6.0 / (fan_in + fan_out))
        return jax.random.uniform(k, (fan_in, fan_out), jnp.float32, -r, r)

    k1, k2, k3, k4 = jax.random.split(key, 4)
    return {
        "w1_r1": glorot(k1, num_features, hidden1),
        "w1_r2": glorot(k2, num_features, hidden1),
        "w2_r1": glorot(k3, hidden1, hidden2),
        "w2_r2": glorot(k4, hidden1, hidden2),
    }


# Pure-JAX f32 reference for correctness check.
def rgcn_forward_ref(x, a1, a2, p):
    h1 = jax.nn.relu(a1 @ (x @ p["w1_r1"]) + a2 @ (x @ p["w1_r2"]))
    h2 = jax.nn.relu(a1 @ (h1 @ p["w2_r1"]) + a2 @ (h1 @ p["w2_r2"]))
    return jnp.mean(h2, axis=0, keepdims=True)


if __name__ == "__main__":
    N = 16            # number of graph nodes
    NUM_FEATURES = 8  # input feature dim
    FEATURES_NONZERO = N * NUM_FEATURES  # only parametrizes sparse dropout; unused at 0.0

    key = jax.random.PRNGKey(0)
    k_x, k_a1, k_a2, k_p = jax.random.split(key, 4)

    x = jax.random.normal(k_x, (N, NUM_FEATURES), jnp.float32)
    # Dense (pre-normalized) adjacency matrices for the two relations.
    adj_1 = jax.random.uniform(k_a1, (N, N), jnp.float32)
    adj_2 = jax.random.uniform(k_a2, (N, N), jnp.float32)
    adj_1 = adj_1 / jnp.sum(adj_1, axis=1, keepdims=True)
    adj_2 = adj_2 / jnp.sum(adj_2, axis=1, keepdims=True)

    params = init_params(k_p, NUM_FEATURES, HIDDEN1, HIDDEN2)
    prepared = prepare_params(params)  # one-time: stack relations + bf16 cast

    # One-time data prep (outside the per-call hot path): bf16 operands.
    x_bf = x.astype(COMPUTE_DTYPE)
    a1_bf = adj_1.astype(COMPUTE_DTYPE)
    a2_bf = adj_2.astype(COMPUTE_DTYPE)

    out = jax.block_until_ready(rgcn_forward(x_bf, a1_bf, a2_bf, prepared))
    ref = jax.block_until_ready(rgcn_forward_ref(x, adj_1, adj_2, params))

    assert out.shape == (1, HIDDEN2), out.shape
    # bf16 operands (f32 accumulation) vs. f32 reference -> loosened tolerance.
    np.testing.assert_allclose(np.asarray(out), np.asarray(ref),
                               rtol=2e-2, atol=2e-2)
    print("KERNEL_OK")
</pallas_src>

<mosaic_0001>
module attributes {stable_mosaic.version = 11 : i64} {
  func.func @_rgcn_fused_kernel(%arg0: i32, %arg1: i32, %arg2: memref<16x8xbf16, #tpu.memory_space<vmem>>, %arg3: memref<16x16xbf16, #tpu.memory_space<vmem>>, %arg4: memref<16x16xbf16, #tpu.memory_space<vmem>>, %arg5: memref<2x8x32xbf16, #tpu.memory_space<vmem>>, %arg6: memref<2x32x16xbf16, #tpu.memory_space<vmem>>, %arg7: memref<1x16xf32, #tpu.memory_space<vmem>>, %arg8: memref<2x16x32xbf16, #tpu.memory_space<vmem>>, %arg9: memref<1x16x32xbf16, #tpu.memory_space<vmem>>, %arg10: memref<2x16x16xbf16, #tpu.memory_space<vmem>>, %arg11: memref<1x16xf32, #tpu.memory_space<vmem>>) attributes {dimension_semantics = [#tpu.dimension_semantics<arbitrary>, #tpu.dimension_semantics<arbitrary>], iteration_bounds = array<i64: 2, 1>, scalar_prefetch = 0 : i64, scratch_operands = 4 : i64, tpu.core_type = #tpu.core_type<tc>, window_params = [{pipeline_mode = #tpu.pipeline_mode<synchronous>, transform_indices = @transform_0, window_bounds = array<i64: 16, 8>}, {transform_indices = @transform_1, window_bounds = array<i64: 16, 16>}, {transform_indices = @transform_2, window_bounds = array<i64: 16, 16>}, {pipeline_mode = #tpu.pipeline_mode<synchronous>, transform_indices = @transform_3, window_bounds = array<i64: 2, 8, 32>}, {pipeline_mode = #tpu.pipeline_mode<synchronous>, transform_indices = @transform_4, window_bounds = array<i64: 2, 32, 16>}, {pipeline_mode = #tpu.pipeline_mode<synchronous>, transform_indices = @transform_5, window_bounds = array<i64: 1, 16>}]} {
    %c0 = arith.constant 0 : index
    %c0_0 = arith.constant 0 : index
    %0 = vector.load %arg3[%c0, %c0_0] : memref<16x16xbf16, #tpu.memory_space<vmem>>, vector<16x16xbf16>
    %c0_1 = arith.constant 0 : index
    %c0_2 = arith.constant 0 : index
    %1 = vector.load %arg4[%c0_1, %c0_2] : memref<16x16xbf16, #tpu.memory_space<vmem>>, vector<16x16xbf16>
    %c0_i32 = arith.constant 0 : i32
    %2 = arith.cmpi eq, %arg0, %c0_i32 : i32
    %c0_i32_3 = arith.constant 0 : i32
    %3 = arith.cmpi eq, %arg1, %c0_i32_3 : i32
    %4 = arith.andi %2, %3 : i1
    %5 = arith.extui %4 : i1 to i32
    %c0_i32_4 = arith.constant 0 : i32
    %6 = arith.cmpi ne, %5, %c0_i32_4 : i32
    scf.if %6 {
      %c0_14 = arith.constant 0 : index
      %c0_15 = arith.constant 0 : index
      %23 = vector.load %arg2[%c0_14, %c0_15] : memref<16x8xbf16, #tpu.memory_space<vmem>>, vector<16x8xbf16>
      %c0_16 = arith.constant 0 : index
      %c0_17 = arith.constant 0 : index
      %c0_18 = arith.constant 0 : index
      %24 = vector.load %arg5[%c0_16, %c0_17, %c0_18] : memref<2x8x32xbf16, #tpu.memory_space<vmem>>, vector<1x8x32xbf16>
      %25 = vector.shape_cast %24 : vector<1x8x32xbf16> to vector<8x32xbf16>
      %cst = arith.constant dense<0.000000e+00> : vector<16x32xf32>
      %26 = tpu.matmul %23, %25, %cst {dimension_numbers = #tpu.dot_dimension_numbers<[1], [0], [0], [1], [0, 0, 1, 1], [], []>} : vector<16x8xbf16>, vector<8x32xbf16>, vector<16x32xf32> -> vector<16x32xf32>
      %27 = arith.truncf %26 : vector<16x32xf32> to vector<16x32xbf16>
      %c0_19 = arith.constant 0 : index
      %c0_20 = arith.constant 0 : index
      %c0_21 = arith.constant 0 : index
      %28 = vector.load %arg8[%c0_19, %c0_20, %c0_21] : memref<2x16x32xbf16, #tpu.memory_space<vmem>>, vector<1x16x32xbf16>
      %29 = vector.shape_cast %28 : vector<1x16x32xbf16> to vector<16x32xbf16>
      %30 = vector.shape_cast %27 : vector<16x32xbf16> to vector<1x16x32xbf16>
      tpu.vector_store %arg8[%c0_19, %c0_20, %c0_21], %30 {strides = array<i32>} : memref<2x16x32xbf16, #tpu.memory_space<vmem>>, vector<1x16x32xbf16>,
      %c1 = arith.constant 1 : index
      %c0_22 = arith.constant 0 : index
      %c0_23 = arith.constant 0 : index
      %31 = vector.load %arg5[%c1, %c0_22, %c0_23] : memref<2x8x32xbf16, #tpu.memory_space<vmem>>, vector<1x8x32xbf16>
      %32 = vector.shape_cast %31 : vector<1x8x32xbf16> to vector<8x32xbf16>
      %cst_24 = arith.constant dense<0.000000e+00> : vector<16x32xf32>
      %33 = tpu.matmul %23, %32, %cst_24 {dimension_numbers = #tpu.dot_dimension_numbers<[1], [0], [0], [1], [0, 0, 1, 1], [], []>} : vector<16x8xbf16>, vector<8x32xbf16>, vector<16x32xf32> -> vector<16x32xf32>
      %34 = arith.truncf %33 : vector<16x32xf32> to vector<16x32xbf16>
      %c1_25 = arith.constant 1 : index
      %c0_26 = arith.constant 0 : index
      %c0_27 = arith.constant 0 : index
      %35 = vector.load %arg8[%c1_25, %c0_26, %c0_27] : memref<2x16x32xbf16, #tpu.memory_space<vmem>>, vector<1x16x32xbf16>
      %36 = vector.shape_cast %35 : vector<1x16x32xbf16> to vector<16x32xbf16>
      %37 = vector.shape_cast %34 : vector<16x32xbf16> to vector<1x16x32xbf16>
      tpu.vector_store %arg8[%c1_25, %c0_26, %c0_27], %37 {strides = array<i32>} : memref<2x16x32xbf16, #tpu.memory_space<vmem>>, vector<1x16x32xbf16>,
    } else {
    }
    %c0_i32_5 = arith.constant 0 : i32
    %7 = arith.cmpi eq, %arg0, %c0_i32_5 : i32
    %8 = arith.extui %7 : i1 to i32
    %c0_i32_6 = arith.constant 0 : i32
    %9 = arith.cmpi ne, %8, %c0_i32_6 : i32
    scf.if %9 {
      %c0_14 = arith.constant 0 : index
      %c0_15 = arith.constant 0 : index
      %c0_16 = arith.constant 0 : index
      %23 = vector.load %arg8[%c0_14, %c0_15, %c0_16] : memref<2x16x32xbf16, #tpu.memory_space<vmem>>, vector<1x16x32xbf16>
      %24 = vector.shape_cast %23 : vector<1x16x32xbf16> to vector<16x32xbf16>
      %cst = arith.constant dense<0.000000e+00> : vector<16x32xf32>
      %25 = tpu.matmul %0, %24, %cst {dimension_numbers = #tpu.dot_dimension_numbers<[1], [0], [0], [1], [0, 0, 1, 1], [], []>} : vector<16x16xbf16>, vector<16x32xbf16>, vector<16x32xf32> -> vector<16x32xf32>
      %c1 = arith.constant 1 : index
      %c0_17 = arith.constant 0 : index
      %c0_18 = arith.constant 0 : index
      %26 = vector.load %arg8[%c1, %c0_17, %c0_18] : memref<2x16x32xbf16, #tpu.memory_space<vmem>>, vector<1x16x32xbf16>
      %27 = vector.shape_cast %26 : vector<1x16x32xbf16> to vector<16x32xbf16>
      %cst_19 = arith.constant dense<0.000000e+00> : vector<16x32xf32>
      %28 = tpu.matmul %1, %27, %cst_19 {dimension_numbers = #tpu.dot_dimension_numbers<[1], [0], [0], [1], [0, 0, 1, 1], [], []>} : vector<16x16xbf16>, vector<16x32xbf16>, vector<16x32xf32> -> vector<16x32xf32>
      %29 = arith.addf %25, %28 : vector<16x32xf32>
      %cst_20 = arith.constant 0.000000e+00 : f32
      %30 = vector.broadcast %cst_20 : f32 to vector<16x32xf32>
      %31 = arith.maximumf %29, %30 : vector<16x32xf32>
      %32 = arith.truncf %31 : vector<16x32xf32> to vector<16x32xbf16>
      %33 = arith.index_cast %arg1 : i32 to index
      %c0_21 = arith.constant 0 : index
      %c0_22 = arith.constant 0 : index
      %34 = vector.load %arg9[%33, %c0_21, %c0_22] : memref<1x16x32xbf16, #tpu.memory_space<vmem>>, vector<1x16x32xbf16>
      %35 = vector.shape_cast %34 : vector<1x16x32xbf16> to vector<16x32xbf16>
      %36 = vector.shape_cast %32 : vector<16x32xbf16> to vector<1x16x32xbf16>
      tpu.vector_store %arg9[%33, %c0_21, %c0_22], %36 {strides = array<i32>} : memref<1x16x32xbf16, #tpu.memory_space<vmem>>, vector<1x16x32xbf16>,
    } else {
    }
    %c1_i32 = arith.constant 1 : i32
    %10 = arith.cmpi eq, %arg0, %c1_i32 : i32
    %c0_i32_7 = arith.constant 0 : i32
    %11 = arith.cmpi eq, %arg1, %c0_i32_7 : i32
    %12 = arith.andi %10, %11 : i1
    %13 = arith.extui %12 : i1 to i32
    %c0_i32_8 = arith.constant 0 : i32
    %14 = arith.cmpi ne, %13, %c0_i32_8 : i32
    scf.if %14 {
      %c0_14 = arith.constant 0 : index
      %c0_15 = arith.constant 0 : index
      %c0_16 = arith.constant 0 : index
      %23 = vector.load %arg9[%c0_14, %c0_15, %c0_16] : memref<1x16x32xbf16, #tpu.memory_space<vmem>>, vector<1x16x32xbf16>
      %24 = vector.shape_cast %23 : vector<1x16x32xbf16> to vector<16x32xbf16>
      %c0_17 = arith.constant 0 : index
      %c0_18 = arith.constant 0 : index
      %c0_19 = arith.constant 0 : index
      %25 = vector.load %arg6[%c0_17, %c0_18, %c0_19] : memref<2x32x16xbf16, #tpu.memory_space<vmem>>, vector<1x32x16xbf16>
      %26 = vector.shape_cast %25 : vector<1x32x16xbf16> to vector<32x16xbf16>
      %cst = arith.constant dense<0.000000e+00> : vector<16x16xf32>
      %27 = tpu.matmul %24, %26, %cst {dimension_numbers = #tpu.dot_dimension_numbers<[1], [0], [0], [1], [0, 0, 1, 1], [], []>} : vector<16x32xbf16>, vector<32x16xbf16>, vector<16x16xf32> -> vector<16x16xf32>
      %28 = arith.truncf %27 : vector<16x16xf32> to vector<16x16xbf16>
      %c0_20 = arith.constant 0 : index
      %c0_21 = arith.constant 0 : index
      %c0_22 = arith.constant 0 : index
      %29 = vector.load %arg10[%c0_20, %c0_21, %c0_22] : memref<2x16x16xbf16, #tpu.memory_space<vmem>>, vector<1x16x16xbf16>
      %30 = vector.shape_cast %29 : vector<1x16x16xbf16> to vector<16x16xbf16>
      %31 = vector.shape_cast %28 : vector<16x16xbf16> to vector<1x16x16xbf16>
      tpu.vector_store %arg10[%c0_20, %c0_21, %c0_22], %31 {strides = array<i32>} : memref<2x16x16xbf16, #tpu.memory_space<vmem>>, vector<1x16x16xbf16>,
      %c1 = arith.constant 1 : index
      %c0_23 = arith.constant 0 : index
      %c0_24 = arith.constant 0 : index
      %32 = vector.load %arg6[%c1, %c0_23, %c0_24] : memref<2x32x16xbf16, #tpu.memory_space<vmem>>, vector<1x32x16xbf16>
      %33 = vector.shape_cast %32 : vector<1x32x16xbf16> to vector<32x16xbf16>
      %cst_25 = arith.constant dense<0.000000e+00> : vector<16x16xf32>
      %34 = tpu.matmul %24, %33, %cst_25 {dimension_numbers = #tpu.dot_dimension_numbers<[1], [0], [0], [1], [0, 0, 1, 1], [], []>} : vector<16x32xbf16>, vector<32x16xbf16>, vector<16x16xf32> -> vector<16x16xf32>
      %35 = arith.truncf %34 : vector<16x16xf32> to vector<16x16xbf16>
      %c1_26 = arith.constant 1 : index
      %c0_27 = arith.constant 0 : index
      %c0_28 = arith.constant 0 : index
      %36 = vector.load %arg10[%c1_26, %c0_27, %c0_28] : memref<2x16x16xbf16, #tpu.memory_space<vmem>>, vector<1x16x16xbf16>
      %37 = vector.shape_cast %36 : vector<1x16x16xbf16> to vector<16x16xbf16>
      %38 = vector.shape_cast %35 : vector<16x16xbf16> to vector<1x16x16xbf16>
      tpu.vector_store %arg10[%c1_26, %c0_27, %c0_28], %38 {strides = array<i32>} : memref<2x16x16xbf16, #tpu.memory_space<vmem>>, vector<1x16x16xbf16>,
      %cst_29 = arith.constant 0.000000e+00 : f32
      %39 = vector.broadcast %cst_29 : f32 to vector<1x16xf32>
      %c0_30 = arith.constant 0 : index
      %c0_31 = arith.constant 0 : index
      %40 = vector.load %arg11[%c0_30, %c0_31] : memref<1x16xf32, #tpu.memory_space<vmem>>, vector<1x16xf32>
      tpu.vector_store %arg11[%c0_30, %c0_31], %39 {strides = array<i32>} : memref<1x16xf32, #tpu.memory_space<vmem>>, vector<1x16xf32>,
    } else {
    }
    %c1_i32_9 = arith.constant 1 : i32
    %15 = arith.cmpi eq, %arg0, %c1_i32_9 : i32
    %16 = arith.extui %15 : i1 to i32
    %c0_i32_10 = arith.constant 0 : i32
    %17 = arith.cmpi ne, %16, %c0_i32_10 : i32
    scf.if %17 {
      %c0_14 = arith.constant 0 : index
      %c0_15 = arith.constant 0 : index
      %c0_16 = arith.constant 0 : index
      %23 = vector.load %arg10[%c0_14, %c0_15, %c0_16] : memref<2x16x16xbf16, #tpu.memory_space<vmem>>, vector<1x16x16xbf16>
      %24 = vector.shape_cast %23 : vector<1x16x16xbf16> to vector<16x16xbf16>
      %cst = arith.constant dense<0.000000e+00> : vector<16x16xf32>
      %25 = tpu.matmul %0, %24, %cst {dimension_numbers = #tpu.dot_dimension_numbers<[1], [0], [0], [1], [0, 0, 1, 1], [], []>} : vector<16x16xbf16>, vector<16x16xbf16>, vector<16x16xf32> -> vector<16x16xf32>
      %c1 = arith.constant 1 : index
      %c0_17 = arith.constant 0 : index
      %c0_18 = arith.constant 0 : index
      %26 = vector.load %arg10[%c1, %c0_17, %c0_18] : memref<2x16x16xbf16, #tpu.memory_space<vmem>>, vector<1x16x16xbf16>
      %27 = vector.shape_cast %26 : vector<1x16x16xbf16> to vector<16x16xbf16>
      %cst_19 = arith.constant dense<0.000000e+00> : vector<16x16xf32>
      %28 = tpu.matmul %1, %27, %cst_19 {dimension_numbers = #tpu.dot_dimension_numbers<[1], [0], [0], [1], [0, 0, 1, 1], [], []>} : vector<16x16xbf16>, vector<16x16xbf16>, vector<16x16xf32> -> vector<16x16xf32>
      %29 = arith.addf %25, %28 : vector<16x16xf32>
      %cst_20 = arith.constant 0.000000e+00 : f32
      %30 = vector.broadcast %cst_20 : f32 to vector<16x16xf32>
      %31 = arith.maximumf %29, %30 : vector<16x16xf32>
      %c0_21 = arith.constant 0 : index
      %c0_22 = arith.constant 0 : index
      %32 = vector.load %arg11[%c0_21, %c0_22] : memref<1x16xf32, #tpu.memory_space<vmem>>, vector<1x16xf32>
      %cst_23 = arith.constant dense<0.000000e+00> : vector<16xf32>
      %33 = vector.multi_reduction <add>, %31, %cst_23 [0] : vector<16x16xf32> to vector<16xf32>
      %34 = vector.shape_cast %33 : vector<16xf32> to vector<1x16xf32>
      %35 = arith.addf %32, %34 : vector<1x16xf32>
      %c0_24 = arith.constant 0 : index
      %c0_25 = arith.constant 0 : index
      %36 = vector.load %arg11[%c0_24, %c0_25] : memref<1x16xf32, #tpu.memory_space<vmem>>, vector<1x16xf32>
      tpu.vector_store %arg11[%c0_24, %c0_25], %35 {strides = array<i32>} : memref<1x16xf32, #tpu.memory_space<vmem>>, vector<1x16xf32>,
    } else {
    }
    %c1_i32_11 = arith.constant 1 : i32
    %18 = arith.cmpi eq, %arg0, %c1_i32_11 : i32
    %c0_i32_12 = arith.constant 0 : i32
    %19 = arith.cmpi eq, %arg1, %c0_i32_12 : i32
    %20 = arith.andi %18, %19 : i1
    %21 = arith.extui %20 : i1 to i32
    %c0_i32_13 = arith.constant 0 : i32
    %22 = arith.cmpi ne, %21, %c0_i32_13 : i32
    scf.if %22 {
      %c0_14 = arith.constant 0 : index
      %c0_15 = arith.constant 0 : index
      %23 = vector.load %arg11[%c0_14, %c0_15] : memref<1x16xf32, #tpu.memory_space<vmem>>, vector<1x16xf32>
      %cst = arith.constant 6.250000e-02 : f32
      %24 = vector.broadcast %cst : f32 to vector<1x16xf32>
      %25 = arith.mulf %23, %24 : vector<1x16xf32>
      %c0_16 = arith.constant 0 : index
      %c0_17 = arith.constant 0 : index
      %26 = vector.load %arg7[%c0_16, %c0_17] : memref<1x16xf32, #tpu.memory_space<vmem>>, vector<1x16xf32>
      tpu.vector_store %arg7[%c0_16, %c0_17], %25 {strides = array<i32>} : memref<1x16xf32, #tpu.memory_space<vmem>>, vector<1x16xf32>,
    } else {
    }
    return
  }
  func.func @transform_0(%arg0: i32, %arg1: i32) -> (i32, i32) {
    %c0_i32 = arith.constant 0 : i32
    %c0_i32_0 = arith.constant 0 : i32
    %c0_i32_1 = arith.constant 0 : i32
    return %c0_i32, %c0_i32_0 : i32, i32
  }
  func.func @transform_1(%arg0: i32, %arg1: i32) -> (i32, i32) {
    %c0_i32 = arith.constant 0 : i32
    %c0_i32_0 = arith.constant 0 : i32
    return %arg1, %c0_i32 : i32, i32
  }
  func.func @transform_2(%arg0: i32, %arg1: i32) -> (i32, i32) {
    %c0_i32 = arith.constant 0 : i32
    %c0_i32_0 = arith.constant 0 : i32
    return %arg1, %c0_i32 : i32, i32
  }
  func.func @transform_3(%arg0: i32, %arg1: i32) -> (i32, i32, i32) {
    %c0_i32 = arith.constant 0 : i32
    %c0_i32_0 = arith.constant 0 : i32
    %c0_i32_1 = arith.constant 0 : i32
    %c0_i32_2 = arith.constant 0 : i32
    return %c0_i32, %c0_i32_0, %c0_i32_1 : i32, i32, i32
  }
  func.func @transform_4(%arg0: i32, %arg1: i32) -> (i32, i32, i32) {
    %c0_i32 = arith.constant 0 : i32
    %c0_i32_0 = arith.constant 0 : i32
    %c0_i32_1 = arith.constant 0 : i32
    %c0_i32_2 = arith.constant 0 : i32
    return %c0_i32, %c0_i32_0, %c0_i32_1 : i32, i32, i32
  }
  func.func @transform_5(%arg0: i32, %arg1: i32) -> (i32, i32) {
    %c0_i32 = arith.constant 0 : i32
    %c0_i32_0 = arith.constant 0 : i32
    %c0_i32_1 = arith.constant 0 : i32
    return %c0_i32, %c0_i32_0 : i32, i32
  }
}

</mosaic_0001>

<llo_original>
// kernel: tpu_custom_call.1
$region0: #{tpu_custom_call.1}
  #allocation0 [shape = 'u32[]', space=smem, size = 0x4, offset = 0x4, fixed_abs, tag = 'smem constant byte address 0x4 - core index']
  #allocation1 [shape = 'u32[144,128]{1,0:T(1,128)}', space=vmem, size = 0x12000, scoped, tag = 'internal scratch']
  #allocation2 [shape = 'bf16[2,16,32]{2,1,0:T(8,128)(2,1)}', space=vmem, size = 0x2000, scoped, tag = 'scratch operand']
  #allocation3 [shape = 'bf16[1,16,32]{2,1,0:T(8,128)(2,1)}', space=vmem, size = 0x1000, scoped, tag = 'scratch operand']
  #allocation4 [shape = 'bf16[2,16,16]{2,1,0:T(8,128)(2,1)}', space=vmem, size = 0x2000, scoped, tag = 'scratch operand']
  #allocation5 [shape = 'f32[1,16]{1,0:T(1,128)}', space=vmem, size = 0x200, scoped, tag = 'scratch operand']
  %s0 = inlined_call_operand.vmem [shape: bf16[16,8], index: 0, kind: input, shape index: {}]
  %s1 = inlined_call_operand.vmem [shape: bf16[16,16], index: 1, kind: input, shape index: {}]
  %s2 = inlined_call_operand.vmem [shape: bf16[16,16], index: 2, kind: input, shape index: {}]
  %s3 = inlined_call_operand.vmem [shape: bf16[2,8,32], index: 3, kind: input, shape index: {}]
  %s4 = inlined_call_operand.vmem [shape: bf16[2,32,16], index: 4, kind: input, shape index: {}]
  %s5 = inlined_call_operand.hbm [shape: f32[1,16], index: 5, kind: output, shape index: {}]
  %s6 = sld [smem:[#allocation0]]
  $region73: #{tpu_custom_call.1} parent=0
    _
  %s8 = ssub.s32 1, %s6
  %s9 = scalar_select 0, %s8, %s6
  $region1: #{tpu_custom_call.1} parent=0
    #allocation6 [shape = 'u8[512]{0}', space=vmem, size = 0x400, scoped, tag = 'output window, operand 0, single buffered']
    #allocation7 [shape = 's32[2]{0}', space=sflag, size = 0x8, scoped, tag = 'scoped memory for tpu_custom_call.1']
    %10 = vsyncpa [#allocation7], 0
    loop: start=0, step=1, limit=4
    $region2: #{tpu_custom_call.1} parent=1 // loop_pre_header
      _
    $region3: #{tpu_custom_call.1} parent=1 // loop_header
      %s12 = sphi 0, %s16
      %p13 = scmp.ge.s32.totalorder %s12, 4
      %s19 = sphi 0, %s31
      %s20 = sphi 0, %s27
      %s21 = sphi 0, %s19
      %s22 = sphi 0, %s20
      %s23 = sphi 0, %s21
      %s24 = sphi 0, %s22
      %s32 = sphi 0, %s32
      %s34 = sphi 0, %s32
      %s35 = sphi 0, %s34
      %s49 = sphi 0, %s35
      %s55 = sphi 0, %s57
      %s58 = sphi 0, %s55
      %s59 = sphi 0, %s58
      %s75 = sphi 0, %s59
      %s81 = sphi 0, %s83
      %s84 = sphi 0, %s81
      %s85 = sphi 0, %s84
      %s101 = sphi 0, %s85
      %s105 = sphi 0, %s105
      %s107 = sphi 0, %s105
      %s108 = sphi 0, %s107
      %s122 = sphi 0, %s108
      %s126 = sphi 0, %s126
      %s128 = sphi 0, %s126
      %s129 = sphi 0, %s128
      %s143 = sphi 0, %s129
      %s147 = sphi 0, %s147
      %s149 = sphi 0, %s147
      %s150 = sphi 0, %s149
      %s164 = sphi 0, %s150
    $region4: #{tpu_custom_call.1} parent=1 // loop_header_branch
      %15 = sbr.rel (%p13) target = $region8
    $region5: #{tpu_custom_call.1} parent=1 // loop_body
      %s17 = ssub.s32 %s12, 1
      %s18 = ssub.s32 %s12, 2
      %s25 = sadd.s32 1, %s20
      %p26 = scmp.ge.s32.totalorder %s25, 1
      %s27 = scalar_select %p26, 0, %s25
      %s28 = sadd.s32 1, %s19
      %s29 = scalar_select %p26, %s28, %s19
      %p30 = scmp.ge.s32.totalorder %s29, 2
      %s31 = scalar_select %p30, 0, %s29
      %s33 = sadd.s32 %s32, 1
      %p36 = scmp.eq.s32.totalorder %s12, 1
      %p37 = scmp.ne.s32.totalorder %s32, %s34
      %p38 = scmp.eq.s32.totalorder %s12, 0
      %p39 = por %p37, %p38
      %p40 = scmp.ne.s32.totalorder %s32, %s34
      %p41 = scmp.eq.s32.totalorder %s17, 1
      %p42 = por %p40, %p41
      %p43 = scmp.ne.s32.totalorder %s34, %s35
      %p44 = scmp.eq.s32.totalorder %s17, 0
      %p45 = por %p43, %p44
      %p46 = scmp.ne.s32.totalorder %s34, %s35
      %p47 = scmp.eq.s32.totalorder %s18, 1
      %p48 = por %p46, %p47
      %p50 = scmp.ne.s32.totalorder %s35, %s49
      %p51 = scmp.eq.s32.totalorder %s18, 0
      %p52 = por %p50, %p51
      %s53 = ssub.s32 %s20, %s27
      %p54 = scmp.eq.s32.totalorder %s53, 0
      %s56 = sadd.s32 %s55, 1
      %s57 = scalar_select %p54, %s55, %s56
      %p60 = pneg %p54
      %p61 = scmp.eq.s32.totalorder %s12, 1
      %p62 = por %p60, %p61
      %p63 = scmp.ne.s32.totalorder %s55, %s58
      %p64 = scmp.eq.s32.totalorder %s12, 0
      %p65 = por %p63, %p64
      %p66 = scmp.ne.s32.totalorder %s55, %s58
      %p67 = scmp.eq.s32.totalorder %s17, 1
      %p68 = por %p66, %p67
      %p69 = scmp.ne.s32.totalorder %s58, %s59
      %p70 = scmp.eq.s32.totalorder %s17, 0
      %p71 = por %p69, %p70
      %p72 = scmp.ne.s32.totalorder %s58, %s59
      %p73 = scmp.eq.s32.totalorder %s18, 1
      %p74 = por %p72, %p73
      %p76 = scmp.ne.s32.totalorder %s59, %s75
      %p77 = scmp.eq.s32.totalorder %s18, 0
      %p78 = por %p76, %p77
      %s79 = ssub.s32 %s20, %s27
      %p80 = scmp.eq.s32.totalorder %s79, 0
      %s82 = sadd.s32 %s81, 1
      %s83 = scalar_select %p80, %s81, %s82
      %p86 = pneg %p80
      %p87 = scmp.eq.s32.totalorder %s12, 1
      %p88 = por %p86, %p87
      %p89 = scmp.ne.s32.totalorder %s81, %s84
      %p90 = scmp.eq.s32.totalorder %s12, 0
      %p91 = por %p89, %p90
      %p92 = scmp.ne.s32.totalorder %s81, %s84
      %p93 = scmp.eq.s32.totalorder %s17, 1
      %p94 = por %p92, %p93
      %p95 = scmp.ne.s32.totalorder %s84, %s85
      %p96 = scmp.eq.s32.totalorder %s17, 0
      %p97 = por %p95, %p96
      %p98 = scmp.ne.s32.totalorder %s84, %s85
      %p99 = scmp.eq.s32.totalorder %s18, 1
      %p100 = por %p98, %p99
      %p102 = scmp.ne.s32.totalorder %s85, %s101
      %p103 = scmp.eq.s32.totalorder %s18, 0
      %p104 = por %p102, %p103
      %s106 = sadd.s32 %s105, 1
      %p109 = scmp.eq.s32.totalorder %s12, 1
      %p110 = scmp.ne.s32.totalorder %s105, %s107
      %p111 = scmp.eq.s32.totalorder %s12, 0
      %p112 = por %p110, %p111
      %p113 = scmp.ne.s32.totalorder %s105, %s107
      %p114 = scmp.eq.s32.totalorder %s17, 1
      %p115 = por %p113, %p114
      %p116 = scmp.ne.s32.totalorder %s107, %s108
      %p117 = scmp.eq.s32.totalorder %s17, 0
      %p118 = por %p116, %p117
      %p119 = scmp.ne.s32.totalorder %s107, %s108
      %p120 = scmp.eq.s32.totalorder %s18, 1
      %p121 = por %p119, %p120
      %p123 = scmp.ne.s32.totalorder %s108, %s122
      %p124 = scmp.eq.s32.totalorder %s18, 0
      %p125 = por %p123, %p124
      %s127 = sadd.s32 %s126, 1
      %p130 = scmp.eq.s32.totalorder %s12, 1
      %p131 = scmp.ne.s32.totalorder %s126, %s128
      %p132 = scmp.eq.s32.totalorder %s12, 0
      %p133 = por %p131, %p132
      %p134 = scmp.ne.s32.totalorder %s126, %s128
      %p135 = scmp.eq.s32.totalorder %s17, 1
      %p136 = por %p134, %p135
      %p137 = scmp.ne.s32.totalorder %s128, %s129
      %p138 = scmp.eq.s32.totalorder %s17, 0
      %p139 = por %p137, %p138
      %p140 = scmp.ne.s32.totalorder %s128, %s129
      %p141 = scmp.eq.s32.totalorder %s18, 1
      %p142 = por %p140, %p141
      %p144 = scmp.ne.s32.totalorder %s129, %s143
      %p145 = scmp.eq.s32.totalorder %s18, 0
      %p146 = por %p144, %p145
      %s148 = sadd.s32 %s147, 1
      %p151 = scmp.eq.s32.totalorder %s12, 1
      %p152 = scmp.ne.s32.totalorder %s147, %s149
      %p153 = scmp.eq.s32.totalorder %s12, 0
      %p154 = por %p152, %p153
      %p155 = scmp.ne.s32.totalorder %s147, %s149
      %p156 = scmp.eq.s32.totalorder %s17, 1
      %p157 = por %p155, %p156
      %p158 = scmp.ne.s32.totalorder %s149, %s150
      %p159 = scmp.eq.s32.totalorder %s17, 0
      %p160 = por %p158, %p159
      %p161 = scmp.ne.s32.totalorder %s149, %s150
      %p162 = scmp.eq.s32.totalorder %s18, 1
      %p163 = por %p161, %p162
      %p165 = scmp.ne.s32.totalorder %s150, %s164
      %p166 = scmp.eq.s32.totalorder %s18, 0
      %p167 = por %p165, %p166
      %p168 = scmp.le.s32.totalorder 1, %s12
      %p169 = scmp.lt.s32.totalorder %s12, 3
      %p170 = pnand %p168, %p169
      %p171 = pneg %p170
      // Predicated region
      $region9: #{tpu_custom_call.1} parent=5 // pred_check
        _
      $region10: #{tpu_custom_call.1} parent=5 // pred_check_branch
        %173 = sbr.rel (%p170) target = $region12
      $region11: #{tpu_custom_call.1} parent=5 // pred_region
        %s174 = ssub.s32 %s12, 1
        // Predicated region
        $region13: #{tpu_custom_call.1} parent=11 // pred_check
          %p175 = pneg %p45
        $region14: #{tpu_custom_call.1} parent=11 // pred_check_branch
          %177 = sbr.rel (%p175) target = $region16
        $region15: #{tpu_custom_call.1} parent=11 // pred_region
          _
        $region16: #{tpu_custom_call.1} parent=11 // pred_fallthru
          _
        // Predicated region
        $region17: #{tpu_custom_call.1} parent=11 // pred_check
          %p178 = pneg %p71
        $region18: #{tpu_custom_call.1} parent=11 // pred_check_branch
          %180 = sbr.rel (%p178) target = $region20
        $region19: #{tpu_custom_call.1} parent=11 // pred_region
          %s181 = smul.u32 2, %s22
          %p182 = scmp.lt.s32.totalorder %s181, 1
          %s183 = scalar_select %p182, %s181, 1
          %s184 = smul.addr %s183, 4
          %s185 = scalar_lea.vmem %s1, %s184
          %s186 = smul.u32 2, %s22
        $region20: #{tpu_custom_call.1} parent=11 // pred_fallthru
          _
        // Predicated region
        $region21: #{tpu_custom_call.1} parent=11 // pred_check
          %p187 = pneg %p97
        $region22: #{tpu_custom_call.1} parent=11 // pred_check_branch
          %189 = sbr.rel (%p187) target = $region24
        $region23: #{tpu_custom_call.1} parent=11 // pred_region
          %s190 = smul.u32 2, %s22
          %p191 = scmp.lt.s32.totalorder %s190, 1
          %s192 = scalar_select %p191, %s190, 1
          %s193 = smul.addr %s192, 4
          %s194 = scalar_lea.vmem %s2, %s193
          %s195 = smul.u32 2, %s22
        $region24: #{tpu_custom_call.1} parent=11 // pred_fallthru
          _
        // Predicated region
        $region25: #{tpu_custom_call.1} parent=11 // pred_check
          %p196 = pneg %p118
        $region26: #{tpu_custom_call.1} parent=11 // pred_check_branch
          %198 = sbr.rel (%p196) target = $region28
        $region27: #{tpu_custom_call.1} parent=11 // pred_region
          _
        $region28: #{tpu_custom_call.1} parent=11 // pred_fallthru
          _
        // Predicated region
        $region29: #{tpu_custom_call.1} parent=11 // pred_check
          %p199 = pneg %p139
        $region30: #{tpu_custom_call.1} parent=11 // pred_check_branch
          %201 = sbr.rel (%p199) target = $region32
        $region31: #{tpu_custom_call.1} parent=11 // pred_region
          _
        $region32: #{tpu_custom_call.1} parent=11 // pred_fallthru
          _
      $region12: #{tpu_custom_call.1} parent=5 // pred_fallthru
        _
      %p202 = scmp.lt.s32.totalorder %s12, 2
      // Predicated region
      $region33: #{tpu_custom_call.1} parent=5 // pred_check
        %p203 = pneg %p202
      $region34: #{tpu_custom_call.1} parent=5 // pred_check_branch
        %205 = sbr.rel (%p203) target = $region36
      $region35: #{tpu_custom_call.1} parent=5 // pred_region
        _
      $region36: #{tpu_custom_call.1} parent=5 // pred_fallthru
        _
      %p206 = scmp.le.s32.totalorder 1, %s12
      %p207 = scmp.lt.s32.totalorder %s12, 3
      %p208 = pnand %p206, %p207
      %p209 = pneg %p208
      // Predicated region
      $region37: #{tpu_custom_call.1} parent=5 // pred_check
        _
      $region38: #{tpu_custom_call.1} parent=5 // pred_check_branch
        %211 = sbr.rel (%p208) target = $region40
      $region39: #{tpu_custom_call.1} parent=5 // pred_region
        %s212 = ssub.s32 %s12, 1
        %p213 = pneg %p45
        %p214 = pneg %p42
        %s215 = smul.u32 2, %s22
        %p216 = scmp.lt.s32.totalorder %s215, 1
        %s217 = scalar_select %p216, %s215, 1
        %s218 = smul.addr %s217, 4
        %s219 = scalar_lea.vmem %s1, %s218
        %p220 = pneg %p71
        %p221 = pneg %p68
        %s222 = smul.u32 2, %s22
        %p223 = scmp.lt.s32.totalorder %s222, 1
        %s224 = scalar_select %p223, %s222, 1
        %s225 = smul.addr %s224, 4
        %s226 = scalar_lea.vmem %s2, %s225
        %p227 = pneg %p97
        %p228 = pneg %p94
        %p229 = pneg %p118
        %p230 = pneg %p115
        %p231 = pneg %p139
        %p232 = pneg %p136
        %p233 = pneg %p160
        %p234 = pneg %p157
        %s235 = smul.u32 2, %s22
        %p236 = scmp.lt.s32.totalorder %s235, 1
        %s237 = scalar_select %p236, %s235, 1
        %s238 = smul.addr %s237, 4
        %s239 = scalar_lea.vmem %s1, %s238
        %s240 = smul.u32 2, %s22
        %s241 = smul.u32 2, %s22
        %p242 = scmp.lt.s32.totalorder %s241, 1
        %s243 = scalar_select %p242, %s241, 1
        %s244 = smul.addr %s243, 4
        %s245 = scalar_lea.vmem %s2, %s244
        %s246 = smul.u32 2, %s22
        %v248 = vld [vmem:[%s239] sm:$0xf]
        %v249 = vld [vmem:[%s239 + $0x4] sm:$0xf]
        %v250 = vld [vmem:[%s245] sm:$0xf]
        %v251 = vld [vmem:[%s245 + $0x4] sm:$0xf]
        %p252 = scmp.eq.s32.totalorder %s21, 0
        %p253 = scmp.eq.s32.totalorder %s22, 0
        %p254 = pnand %p252, %p253
        %p255 = pneg %p254
        // Predicated region
        $region41: #{tpu_custom_call.1} parent=39 // pred_check
          _
        $region42: #{tpu_custom_call.1} parent=39 // pred_check_branch
          %257 = sbr.rel (%p254) target = $region44
        $region43: #{tpu_custom_call.1} parent=39 // pred_region
          %v258 = vld [vmem:[%s0] sm:$0xf]
          %v259 = vld [vmem:[%s0 + $0x4] sm:$0xf]
          %v260 = vld [vmem:[%s3] sm:$0xf]
          %v263 = vunpack.c.l.b16 %v258
          %v264 = vunpack.c.l.b16 %v259
          %v265 = vpack.c.b16 %v264, %v263
          %vm266 = vcmask 64512
          %v268 = vsel %vm266, %v265, 0
          %vm270 = vcmask 1043456
          %v272 = vsel %vm270, %v260, 0
          %274 = vmatprep.subr.bf16.mxu0 0
          %275 = vmatpush1.bf16.msra.mxu0 0
          %276 = vmatprep.subr.bf16.mxu0 0
          %277 = vmatpush1.bf16.msra.mxu0 0
          %278 = vmatprep.subr.bf16.mxu0 0
          %279 = vmatpush1.bf16.msra.mxu0 0
          %280 = vmatprep.subr.bf16.mxu0 0
          %281 = vmatpush1.bf16.msra.mxu0 0
          %282 = vmatprep.subr.bf16.mxu0 0
          %283 = vmatpush1.bf16.msra.mxu0 0
          %284 = vmatprep.subr.bf16.mxu0 0
          %285 = vmatpush1.bf16.msra.mxu0 0
          %286 = vmatprep.subr.bf16.mxu0 0
          %287 = vmatpush1.bf16.msra.mxu0 0
          %288 = vmatprep.subr.bf16.mxu0 0
          %289 = vmatpush1.bf16.msra.mxu0 %v272
          %290 = vmatprep.subr.bf16.mxu0 0
          %291 = vmatpush2.bf16.msra.mxu0 0
          %292 = vmatprep.subr.bf16.mxu0 0
          %293 = vmatpush2.bf16.msra.mxu0 0
          %294 = vmatprep.subr.bf16.mxu0 0
          %295 = vmatpush2.bf16.msra.mxu0 0
          %296 = vmatprep.subr.bf16.mxu0 0
          %297 = vmatpush2.bf16.msra.mxu0 0
          %298 = vmatprep.subr.bf16.mxu0 0
          %299 = vmatpush2.bf16.msra.mxu0 0
          %300 = vmatprep.subr.bf16.mxu0 0
          %301 = vmatpush2.bf16.msra.mxu0 0
          %302 = vmatprep.subr.bf16.mxu0 0
          %303 = vmatpush2.bf16.msra.mxu0 0
          %304 = vmatprep.subr.bf16.mxu0 0
          %305 = vmatpush2.bf16.msra.mxu0 0
          %306 = vmatprep.mubr.bf16.mxu0 0
          %307 = vmatmul.mubr.bf16.gmra.mxu0 %v268
          %v308 = vpop.f32.mrf.mxu0
          %v309 = vadd.f32 0.0, %v308
          %v310 = vpop.f32.mrf.mxu0
          %v311 = vpop.f32.mrf.mxu0
          %v312 = vadd.f32 0.0, %v311
          %v313 = vpop.f32.mrf.mxu0
          %314 = vdwg.mxu0
          %v315 = vpack.c.bf16 %v312, %v309
          %v317 = vunpack.c.l.b16 %v315
          %v318 = vunpack.c.h.b16 %v315
          %v319 = vpack.c.b16 %v317, %v317
          %v320 = vpack.c.b16 %v318, %v318
          %vm323 = vcmask 257024
          %324 = vst.msk [vmem:[#allocation2] sm:$0xf] %vm323, %v319
          %325 = vst.msk [vmem:[#allocation2 + $0x4] sm:$0xf] %vm323, %v320
          %s326 = scalar_lea.vmem %s3, 4
          %v327 = vld [vmem:[%s326] sm:$0xf]
          %v329 = vsel %vm270, %v327, 0
          %331 = vmatprep.subr.bf16.mxu0 0
          %332 = vmatpush1.bf16.msra.mxu0 0
          %333 = vmatprep.subr.bf16.mxu0 0
          %334 = vmatpush1.bf16.msra.mxu0 0
          %335 = vmatprep.subr.bf16.mxu0 0
          %336 = vmatpush1.bf16.msra.mxu0 0
          %337 = vmatprep.subr.bf16.mxu0 0
          %338 = vmatpush1.bf16.msra.mxu0 0
          %339 = vmatprep.subr.bf16.mxu0 0
          %340 = vmatpush1.bf16.msra.mxu0 0
          %341 = vmatprep.subr.bf16.mxu0 0
          %342 = vmatpush1.bf16.msra.mxu0 0
          %343 = vmatprep.subr.bf16.mxu0 0
          %344 = vmatpush1.bf16.msra.mxu0 0
          %345 = vmatprep.subr.bf16.mxu0 0
          %346 = vmatpush1.bf16.msra.mxu0 %v329
          %347 = vmatprep.subr.bf16.mxu0 0
          %348 = vmatpush2.bf16.msra.mxu0 0
          %349 = vmatprep.subr.bf16.mxu0 0
          %350 = vmatpush2.bf16.msra.mxu0 0
          %351 = vmatprep.subr.bf16.mxu0 0
          %352 = vmatpush2.bf16.msra.mxu0 0
          %353 = vmatprep.subr.bf16.mxu0 0
          %354 = vmatpush2.bf16.msra.mxu0 0
          %355 = vmatprep.subr.bf16.mxu0 0
          %356 = vmatpush2.bf16.msra.mxu0 0
          %357 = vmatprep.subr.bf16.mxu0 0
          %358 = vmatpush2.bf16.msra.mxu0 0
          %359 = vmatprep.subr.bf16.mxu0 0
          %360 = vmatpush2.bf16.msra.mxu0 0
          %361 = vmatprep.subr.bf16.mxu0 0
          %362 = vmatpush2.bf16.msra.mxu0 0
          %363 = vmatprep.mubr.bf16.mxu0 0
          %364 = vmatmul.mubr.bf16.gmra.mxu0 %v268
          %v365 = vpop.f32.mrf.mxu0
          %v366 = vadd.f32 0.0, %v365
          %v367 = vpop.f32.mrf.mxu0
          %v368 = vpop.f32.mrf.mxu0
          %v369 = vadd.f32 0.0, %v368
          %v370 = vpop.f32.mrf.mxu0
          %371 = vdwg.mxu0
          %v372 = vpack.c.bf16 %v369, %v366
          %v374 = vunpack.c.l.b16 %v372
          %v375 = vunpack.c.h.b16 %v372
          %v376 = vpack.c.b16 %v374, %v374
          %v377 = vpack.c.b16 %v375, %v375
          %s380 = scalar_lea.vmem [#allocation2], 8
          %381 = vst.msk [vmem:[%s380] sm:$0xf] %vm323, %v376
          %382 = vst.msk [vmem:[%s380 + $0x4] sm:$0xf] %vm323, %v377
        $region44: #{tpu_custom_call.1} parent=39 // pred_fallthru
          _
        // Predicated region
        $region45: #{tpu_custom_call.1} parent=39 // pred_check
          %p383 = pneg %p252
        $region46: #{tpu_custom_call.1} parent=39 // pred_check_branch
          %385 = sbr.rel (%p383) target = $region48
        $region47: #{tpu_custom_call.1} parent=39 // pred_region
          %v386 = vld [vmem:[#allocation2] sm:$0xf]
          %v387 = vld [vmem:[#allocation2 + $0x4] sm:$0xf]
          %s388 = scalar_lea.vmem [#allocation2], 8
          %v389 = vld [vmem:[%s388] sm:$0xf]
          %v390 = vld [vmem:[%s388 + $0x4] sm:$0xf]
          %v393 = vunpack.c.l.b16 %v250
          %v394 = vunpack.c.l.b16 %v251
          %v395 = vpack.c.b16 %v394, %v393
          %v398 = vunpack.c.l.b16 %v389
          %v399 = vunpack.c.l.b16 %v390
          %v400 = vpack.c.b16 %v399, %v398
          %vm402 = vcmask 130048
          %v404 = vsel %vm402, %v395, 0
          %406 = vmatprep.subr.bf16.mxu0 0
          %407 = vmatpush1.bf16.msra.mxu0 0
          %408 = vmatprep.subr.bf16.mxu0 0
          %409 = vmatpush1.bf16.msra.mxu0 0
          %410 = vmatprep.subr.bf16.mxu0 0
          %411 = vmatpush1.bf16.msra.mxu0 0
          %412 = vmatprep.subr.bf16.mxu0 0
          %413 = vmatpush1.bf16.msra.mxu0 0
          %414 = vmatprep.subr.bf16.mxu0 0
          %415 = vmatpush1.bf16.msra.mxu0 0
          %416 = vmatprep.subr.bf16.mxu0 0
          %417 = vmatpush1.bf16.msra.mxu0 0
          %418 = vmatprep.subr.bf16.mxu0 0
          %419 = vmatpush1.bf16.msra.mxu0 0
          %420 = vmatprep.subr.bf16.mxu0 0
          %421 = vmatpush1.bf16.msra.mxu0 %v400
          %422 = vmatprep.subr.bf16.mxu0 0
          %423 = vmatpush2.bf16.msra.mxu0 0
          %424 = vmatprep.subr.bf16.mxu0 0
          %425 = vmatpush2.bf16.msra.mxu0 0
          %426 = vmatprep.subr.bf16.mxu0 0
          %427 = vmatpush2.bf16.msra.mxu0 0
          %428 = vmatprep.subr.bf16.mxu0 0
          %429 = vmatpush2.bf16.msra.mxu0 0
          %430 = vmatprep.subr.bf16.mxu0 0
          %431 = vmatpush2.bf16.msra.mxu0 0
          %432 = vmatprep.subr.bf16.mxu0 0
          %433 = vmatpush2.bf16.msra.mxu0 0
          %434 = vmatprep.subr.bf16.mxu0 0
          %435 = vmatpush2.bf16.msra.mxu0 0
          %436 = vmatprep.subr.bf16.mxu0 0
          %437 = vmatpush2.bf16.msra.mxu0 0
          %438 = vmatprep.mubr.bf16.mxu0 0
          %439 = vmatmul.mubr.bf16.gmra.mxu0 %v404
          %v440 = vpop.f32.mrf.mxu0
          %v441 = vadd.f32 0.0, %v440
          %v442 = vpop.f32.mrf.mxu0
          %v443 = vpop.f32.mrf.mxu0
          %v444 = vadd.f32 0.0, %v443
          %v445 = vpop.f32.mrf.mxu0
          %446 = vdwg.mxu0
          %v449 = vunpack.c.l.b16 %v248
          %v450 = vunpack.c.l.b16 %v249
          %v451 = vpack.c.b16 %v450, %v449
          %v454 = vunpack.c.l.b16 %v386
          %v455 = vunpack.c.l.b16 %v387
          %v456 = vpack.c.b16 %v455, %v454
          %v459 = vsel %vm402, %v451, 0
          %461 = vmatprep.subr.bf16.mxu0 0
          %462 = vmatpush1.bf16.msra.mxu0 0
          %463 = vmatprep.subr.bf16.mxu0 0
          %464 = vmatpush1.bf16.msra.mxu0 0
          %465 = vmatprep.subr.bf16.mxu0 0
          %466 = vmatpush1.bf16.msra.mxu0 0
          %467 = vmatprep.subr.bf16.mxu0 0
          %468 = vmatpush1.bf16.msra.mxu0 0
          %469 = vmatprep.subr.bf16.mxu0 0
          %470 = vmatpush1.bf16.msra.mxu0 0
          %471 = vmatprep.subr.bf16.mxu0 0
          %472 = vmatpush1.bf16.msra.mxu0 0
          %473 = vmatprep.subr.bf16.mxu0 0
          %474 = vmatpush1.bf16.msra.mxu0 0
          %475 = vmatprep.subr.bf16.mxu0 0
          %476 = vmatpush1.bf16.msra.mxu0 %v456
          %477 = vmatprep.subr.bf16.mxu0 0
          %478 = vmatpush2.bf16.msra.mxu0 0
          %479 = vmatprep.subr.bf16.mxu0 0
          %480 = vmatpush2.bf16.msra.mxu0 0
          %481 = vmatprep.subr.bf16.mxu0 0
          %482 = vmatpush2.bf16.msra.mxu0 0
          %483 = vmatprep.subr.bf16.mxu0 0
          %484 = vmatpush2.bf16.msra.mxu0 0
          %485 = vmatprep.subr.bf16.mxu0 0
          %486 = vmatpush2.bf16.msra.mxu0 0
          %487 = vmatprep.subr.bf16.mxu0 0
          %488 = vmatpush2.bf16.msra.mxu0 0
          %489 = vmatprep.subr.bf16.mxu0 0
          %490 = vmatpush2.bf16.msra.mxu0 0
          %491 = vmatprep.subr.bf16.mxu0 0
          %492 = vmatpush2.bf16.msra.mxu0 0
          %493 = vmatprep.mubr.bf16.mxu0 0
          %494 = vmatmul.mubr.bf16.gmra.mxu0 %v459
          %v495 = vpop.f32.mrf.mxu0
          %v496 = vadd.f32 %v441, %v495
          %v497 = vpop.f32.mrf.mxu0
          %v498 = vpop.f32.mrf.mxu0
          %v499 = vadd.f32 %v444, %v498
          %v500 = vpop.f32.mrf.mxu0
          %501 = vdwg.mxu0
          %v502 = vmax.f32 %v496, 0.0
          %v503 = vmax.f32 %v499, 0.0
          %v504 = vpack.c.bf16 %v503, %v502
          %v506 = vunpack.c.l.b16 %v504
          %v507 = vunpack.c.h.b16 %v504
          %v508 = vpack.c.b16 %v506, %v506
          %v509 = vpack.c.b16 %v507, %v507
          %s512 = smul.u32 %s22, 2
          %s513 = smul.addr %s512, 4
          %s514 = scalar_lea.vmem [#allocation3], %s513
          %vm515 = vcmask 257024
          %516 = vst.msk [vmem:[%s514] sm:$0xf] %vm515, %v508
          %517 = vst.msk [vmem:[%s514 + $0x4] sm:$0xf] %vm515, %v509
        $region48: #{tpu_custom_call.1} parent=39 // pred_fallthru
          _
        %p518 = scmp.eq.s32.totalorder %s21, 1
        %p519 = pnand %p518, %p253
        %p520 = pneg %p519
        // Predicated region
        $region49: #{tpu_custom_call.1} parent=39 // pred_check
          _
        $region50: #{tpu_custom_call.1} parent=39 // pred_check_branch
          %522 = sbr.rel (%p519) target = $region52
        $region51: #{tpu_custom_call.1} parent=39 // pred_region
          %v523 = vld [vmem:[#allocation3] sm:$0xf]
          %v524 = vld [vmem:[#allocation3 + $0x4] sm:$0xf]
          %v525 = vld [vmem:[%s4] sm:$0xf]
          %v526 = vld [vmem:[%s4 + $0x4] sm:$0xf]
          %v527 = vld [vmem:[%s4 + $0x8] sm:$0xf]
          %v528 = vld [vmem:[%s4 + $0xc] sm:$0xf]
          %v531 = vunpack.c.l.b16 %v523
          %v532 = vunpack.c.l.b16 %v524
          %v533 = vpack.c.b16 %v532, %v531
          %v538 = vunpack.c.l.b16 %v525
          %v539 = vunpack.c.l.b16 %v526
          %v540 = vunpack.c.l.b16 %v527
          %v541 = vunpack.c.l.b16 %v528
          %v542 = vpack.c.b16 %v539, %v538
          %v543 = vpack.c.b16 %v541, %v540
          %vm546 = vcmask 261120
          %v548 = vsel %vm546, %v533, 0
          %550 = vmatprep.subr.bf16.mxu0 0
          %551 = vmatpush1.bf16.msra.mxu0 0
          %552 = vmatprep.subr.bf16.mxu0 0
          %553 = vmatpush1.bf16.msra.mxu0 0
          %554 = vmatprep.subr.bf16.mxu0 0
          %555 = vmatpush1.bf16.msra.mxu0 0
          %556 = vmatprep.subr.bf16.mxu0 0
          %557 = vmatpush1.bf16.msra.mxu0 0
          %558 = vmatprep.subr.bf16.mxu0 0
          %559 = vmatpush1.bf16.msra.mxu0 0
          %560 = vmatprep.subr.bf16.mxu0 0
          %561 = vmatpush1.bf16.msra.mxu0 0
          %562 = vmatprep.subr.bf16.mxu0 0
          %563 = vmatpush1.bf16.msra.mxu0 %v543
          %564 = vmatprep.subr.bf16.mxu0 0
          %565 = vmatpush1.bf16.msra.mxu0 %v542
          %566 = vmatprep.subr.bf16.mxu0 0
          %567 = vmatpush2.bf16.msra.mxu0 0
          %568 = vmatprep.subr.bf16.mxu0 0
          %569 = vmatpush2.bf16.msra.mxu0 0
          %570 = vmatprep.subr.bf16.mxu0 0
          %571 = vmatpush2.bf16.msra.mxu0 0
          %572 = vmatprep.subr.bf16.mxu0 0
          %573 = vmatpush2.bf16.msra.mxu0 0
          %574 = vmatprep.subr.bf16.mxu0 0
          %575 = vmatpush2.bf16.msra.mxu0 0
          %576 = vmatprep.subr.bf16.mxu0 0
          %577 = vmatpush2.bf16.msra.mxu0 0
          %578 = vmatprep.subr.bf16.mxu0 0
          %579 = vmatpush2.bf16.msra.mxu0 0
          %580 = vmatprep.subr.bf16.mxu0 0
          %581 = vmatpush2.bf16.msra.mxu0 0
          %582 = vmatprep.mubr.bf16.mxu0 0
          %583 = vmatmul.mubr.bf16.gmra.mxu0 %v548
          %v584 = vpop.f32.mrf.mxu0
          %v585 = vadd.f32 0.0, %v584
          %v586 = vpop.f32.mrf.mxu0
          %v587 = vpop.f32.mrf.mxu0
          %v588 = vadd.f32 0.0, %v587
          %v589 = vpop.f32.mrf.mxu0
          %590 = vdwg.mxu0
          %v591 = vpack.c.bf16 %v588, %v585
          %v593 = vunpack.c.l.b16 %v591
          %v594 = vunpack.c.h.b16 %v591
          %v595 = vpack.c.b16 %v593, %v593
          %v596 = vpack.c.b16 %v594, %v594
          %vm599 = vcmask 125952
          %600 = vst.msk [vmem:[#allocation4] sm:$0xf] %vm599, %v595
          %601 = vst.msk [vmem:[#allocation4 + $0x4] sm:$0xf] %vm599, %v596
          %s602 = scalar_lea.vmem %s4, 16
          %v603 = vld [vmem:[%s602] sm:$0xf]
          %v604 = vld [vmem:[%s602 + $0x4] sm:$0xf]
          %v605 = vld [vmem:[%s602 + $0x8] sm:$0xf]
          %v606 = vld [vmem:[%s602 + $0xc] sm:$0xf]
          %v611 = vunpack.c.l.b16 %v603
          %v612 = vunpack.c.l.b16 %v604
          %v613 = vunpack.c.l.b16 %v605
          %v614 = vunpack.c.l.b16 %v606
          %v615 = vpack.c.b16 %v612, %v611
          %v616 = vpack.c.b16 %v614, %v613
          %619 = vmatprep.subr.bf16.mxu0 0
          %620 = vmatpush1.bf16.msra.mxu0 0
          %621 = vmatprep.subr.bf16.mxu0 0
          %622 = vmatpush1.bf16.msra.mxu0 0
          %623 = vmatprep.subr.bf16.mxu0 0
          %624 = vmatpush1.bf16.msra.mxu0 0
          %625 = vmatprep.subr.bf16.mxu0 0
          %626 = vmatpush1.bf16.msra.mxu0 0
          %627 = vmatprep.subr.bf16.mxu0 0
          %628 = vmatpush1.bf16.msra.mxu0 0
          %629 = vmatprep.subr.bf16.mxu0 0
          %630 = vmatpush1.bf16.msra.mxu0 0
          %631 = vmatprep.subr.bf16.mxu0 0
          %632 = vmatpush1.bf16.msra.mxu0 %v616
          %633 = vmatprep.subr.bf16.mxu0 0
          %634 = vmatpush1.bf16.msra.mxu0 %v615
          %635 = vmatprep.subr.bf16.mxu0 0
          %636 = vmatpush2.bf16.msra.mxu0 0
          %637 = vmatprep.subr.bf16.mxu0 0
          %638 = vmatpush2.bf16.msra.mxu0 0
          %639 = vmatprep.subr.bf16.mxu0 0
          %640 = vmatpush2.bf16.msra.mxu0 0
          %641 = vmatprep.subr.bf16.mxu0 0
          %642 = vmatpush2.bf16.msra.mxu0 0
          %643 = vmatprep.subr.bf16.mxu0 0
          %644 = vmatpush2.bf16.msra.mxu0 0
          %645 = vmatprep.subr.bf16.mxu0 0
          %646 = vmatpush2.bf16.msra.mxu0 0
          %647 = vmatprep.subr.bf16.mxu0 0
          %648 = vmatpush2.bf16.msra.mxu0 0
          %649 = vmatprep.subr.bf16.mxu0 0
          %650 = vmatpush2.bf16.msra.mxu0 0
          %651 = vmatprep.mubr.bf16.mxu0 0
          %652 = vmatmul.mubr.bf16.gmra.mxu0 %v548
          %v653 = vpop.f32.mrf.mxu0
          %v654 = vadd.f32 0.0, %v653
          %v655 = vpop.f32.mrf.mxu0
          %v656 = vpop.f32.mrf.mxu0
          %v657 = vadd.f32 0.0, %v656
          %v658 = vpop.f32.mrf.mxu0
          %659 = vdwg.mxu0
          %v660 = vpack.c.bf16 %v657, %v654
          %v662 = vunpack.c.l.b16 %v660
          %v663 = vunpack.c.h.b16 %v660
          %v664 = vpack.c.b16 %v662, %v662
          %v665 = vpack.c.b16 %v663, %v663
          %s668 = scalar_lea.vmem [#allocation4], 8
          %669 = vst.msk [vmem:[%s668] sm:$0xf] %vm599, %v664
          %670 = vst.msk [vmem:[%s668 + $0x4] sm:$0xf] %vm599, %v665
          %vm671 = vcmask 122880
          %672 = vst.msk [vmem:[#allocation5] sm:$0x1] %vm671, 0.0
        $region52: #{tpu_custom_call.1} parent=39 // pred_fallthru
          _
        // Predicated region
        $region53: #{tpu_custom_call.1} parent=39 // pred_check
          %p673 = pneg %p518
        $region54: #{tpu_custom_call.1} parent=39 // pred_check_branch
          %675 = sbr.rel (%p673) target = $region56
        $region55: #{tpu_custom_call.1} parent=39 // pred_region
          %v676 = vld [vmem:[#allocation4] sm:$0xf]
          %v677 = vld [vmem:[#allocation4 + $0x4] sm:$0xf]
          %s678 = scalar_lea.vmem [#allocation4], 8
          %v679 = vld [vmem:[%s678] sm:$0xf]
          %v680 = vld [vmem:[%s678 + $0x4] sm:$0xf]
          %v683 = vunpack.c.l.b16 %v250
          %v684 = vunpack.c.l.b16 %v251
          %v685 = vpack.c.b16 %v684, %v683
          %v688 = vunpack.c.l.b16 %v679
          %v689 = vunpack.c.l.b16 %v680
          %v690 = vpack.c.b16 %v689, %v688
          %vm692 = vcmask 130048
          %v694 = vsel %vm692, %v685, 0
          %696 = vmatprep.subr.bf16.mxu0 0
          %697 = vmatpush1.bf16.msra.mxu0 0
          %698 = vmatprep.subr.bf16.mxu0 0
          %699 = vmatpush1.bf16.msra.mxu0 0
          %700 = vmatprep.subr.bf16.mxu0 0
          %701 = vmatpush1.bf16.msra.mxu0 0
          %702 = vmatprep.subr.bf16.mxu0 0
          %703 = vmatpush1.bf16.msra.mxu0 0
          %704 = vmatprep.subr.bf16.mxu0 0
          %705 = vmatpush1.bf16.msra.mxu0 0
          %706 = vmatprep.subr.bf16.mxu0 0
          %707 = vmatpush1.bf16.msra.mxu0 0
          %708 = vmatprep.subr.bf16.mxu0 0
          %709 = vmatpush1.bf16.msra.mxu0 0
          %710 = vmatprep.subr.bf16.mxu0 0
          %711 = vmatpush1.bf16.msra.mxu0 %v690
          %712 = vmatprep.subr.bf16.mxu0 0
          %713 = vmatpush2.bf16.msra.mxu0 0
          %714 = vmatprep.subr.bf16.mxu0 0
          %715 = vmatpush2.bf16.msra.mxu0 0
          %716 = vmatprep.subr.bf16.mxu0 0
          %717 = vmatpush2.bf16.msra.mxu0 0
          %718 = vmatprep.subr.bf16.mxu0 0
          %719 = vmatpush2.bf16.msra.mxu0 0
          %720 = vmatprep.subr.bf16.mxu0 0
          %721 = vmatpush2.bf16.msra.mxu0 0
          %722 = vmatprep.subr.bf16.mxu0 0
          %723 = vmatpush2.bf16.msra.mxu0 0
          %724 = vmatprep.subr.bf16.mxu0 0
          %725 = vmatpush2.bf16.msra.mxu0 0
          %726 = vmatprep.subr.bf16.mxu0 0
          %727 = vmatpush2.bf16.msra.mxu0 0
          %728 = vmatprep.mubr.bf16.mxu0 0
          %729 = vmatmul.mubr.bf16.gmra.mxu0 %v694
          %v730 = vpop.f32.mrf.mxu0
          %v731 = vadd.f32 0.0, %v730
          %v732 = vpop.f32.mrf.mxu0
          %v733 = vpop.f32.mrf.mxu0
          %v734 = vadd.f32 0.0, %v733
          %v735 = vpop.f32.mrf.mxu0
          %736 = vdwg.mxu0
          %v739 = vunpack.c.l.b16 %v248
          %v740 = vunpack.c.l.b16 %v249
          %v741 = vpack.c.b16 %v740, %v739
          %v744 = vunpack.c.l.b16 %v676
          %v745 = vunpack.c.l.b16 %v677
          %v746 = vpack.c.b16 %v745, %v744
          %v749 = vsel %vm692, %v741, 0
          %751 = vmatprep.subr.bf16.mxu0 0
          %752 = vmatpush1.bf16.msra.mxu0 0
          %753 = vmatprep.subr.bf16.mxu0 0
          %754 = vmatpush1.bf16.msra.mxu0 0
          %755 = vmatprep.subr.bf16.mxu0 0
          %756 = vmatpush1.bf16.msra.mxu0 0
          %757 = vmatprep.subr.bf16.mxu0 0
          %758 = vmatpush1.bf16.msra.mxu0 0
          %759 = vmatprep.subr.bf16.mxu0 0
          %760 = vmatpush1.bf16.msra.mxu0 0
          %761 = vmatprep.subr.bf16.mxu0 0
          %762 = vmatpush1.bf16.msra.mxu0 0
          %763 = vmatprep.subr.bf16.mxu0 0
          %764 = vmatpush1.bf16.msra.mxu0 0
          %765 = vmatprep.subr.bf16.mxu0 0
          %766 = vmatpush1.bf16.msra.mxu0 %v746
          %767 = vmatprep.subr.bf16.mxu0 0
          %768 = vmatpush2.bf16.msra.mxu0 0
          %769 = vmatprep.subr.bf16.mxu0 0
          %770 = vmatpush2.bf16.msra.mxu0 0
          %771 = vmatprep.subr.bf16.mxu0 0
          %772 = vmatpush2.bf16.msra.mxu0 0
          %773 = vmatprep.subr.bf16.mxu0 0
          %774 = vmatpush2.bf16.msra.mxu0 0
          %775 = vmatprep.subr.bf16.mxu0 0
          %776 = vmatpush2.bf16.msra.mxu0 0
          %777 = vmatprep.subr.bf16.mxu0 0
          %778 = vmatpush2.bf16.msra.mxu0 0
          %779 = vmatprep.subr.bf16.mxu0 0
          %780 = vmatpush2.bf16.msra.mxu0 0
          %781 = vmatprep.subr.bf16.mxu0 0
          %782 = vmatpush2.bf16.msra.mxu0 0
          %783 = vmatprep.mubr.bf16.mxu0 0
          %784 = vmatmul.mubr.bf16.gmra.mxu0 %v749
          %v785 = vpop.f32.mrf.mxu0
          %v786 = vadd.f32 %v731, %v785
          %v787 = vpop.f32.mrf.mxu0
          %v788 = vpop.f32.mrf.mxu0
          %v789 = vadd.f32 %v734, %v788
          %v790 = vpop.f32.mrf.mxu0
          %791 = vdwg.mxu0
          %v792 = vmax.f32 %v786, 0.0
          %v793 = vmax.f32 %v789, 0.0
          %v794 = vld [vmem:[#allocation5] sm:$0x1]
          %v795 = vsel %vm692, %v792, 0.0
          %v796 = vsel %vm692, %v793, 0.0
          %v797 = vadd.f32 %v795, %v796
          %v798 = vrot.slane %v797, 4
          %v799 = vadd.f32 %v797, %v798
          %v800 = vrot.slane %v799, 2
          %v801 = vadd.f32 %v799, %v800
          %v802 = vrot.slane %v801, 1
          %v803 = vadd.f32 %v801, %v802
          %v804 = vadd.f32 %v794, %v803
          %vm805 = vcmask 122880
          %806 = vst.msk [vmem:[#allocation5] sm:$0x1] %vm805, %v804
        $region56: #{tpu_custom_call.1} parent=39 // pred_fallthru
          _
        // Predicated region
        $region57: #{tpu_custom_call.1} parent=39 // pred_check
          _
        $region58: #{tpu_custom_call.1} parent=39 // pred_check_branch
          %808 = sbr.rel (%p519) target = $region60
        $region59: #{tpu_custom_call.1} parent=39 // pred_region
          %v809 = vld [vmem:[#allocation5] sm:$0x1]
          %v810 = vmul.f32 %v809, 0.0625
          %vm811 = vcmask 122880
          %812 = vst.msk [vmem:[#allocation6] sm:$0x1] %vm811, %v810
        $region60: #{tpu_custom_call.1} parent=39 // pred_fallthru
          _
        // Predicated region
        $region61: #{tpu_custom_call.1} parent=39 // pred_check
          %p813 = pneg %p157
        $region62: #{tpu_custom_call.1} parent=39 // pred_check_branch
          %815 = sbr.rel (%p813) target = $region64
        $region63: #{tpu_custom_call.1} parent=39 // pred_region
          %s817 = ssub.s32 16, 16
          %818 = vsyncadd [#allocation7], %s817
          %s820 = sshll.u32 [#allocation6], 4
          %s821 = int_to_ptr.vmem [resolvable:$true] %s820
          %823 = dma.vmem_to_hbm [thread:$0]  %s821, 16, %s5, [#allocation7]
        $region64: #{tpu_custom_call.1} parent=39 // pred_fallthru
          _
        // Predicated region
        $region65: #{tpu_custom_call.1} parent=39 // pred_check
          %p824 = pneg %p157
        $region66: #{tpu_custom_call.1} parent=39 // pred_check_branch
          %826 = sbr.rel (%p824) target = $region68
        $region67: #{tpu_custom_call.1} parent=39 // pred_region
          %827 = dma.done [#allocation7], 16
        $region68: #{tpu_custom_call.1} parent=39 // pred_fallthru
          _
      $region40: #{tpu_custom_call.1} parent=5 // pred_fallthru
        _
      %p828 = scmp.le.s32.totalorder 2, %s12
      // Predicated region
      $region69: #{tpu_custom_call.1} parent=5 // pred_check
        %p829 = pneg %p828
      $region70: #{tpu_custom_call.1} parent=5 // pred_check_branch
        %831 = sbr.rel (%p829) target = $region72
      $region71: #{tpu_custom_call.1} parent=5 // pred_region
        %s832 = ssub.s32 %s12, 2
      $region72: #{tpu_custom_call.1} parent=5 // pred_fallthru
        _
    $region6: #{tpu_custom_call.1} parent=1 // loop_footer
      %s16 = sadd.s32 1, %s12
    $region7: #{tpu_custom_call.1} parent=1 // loop_footer_branch
      %11 = sbr.rel target = $region3
    $region8: #{tpu_custom_call.1} parent=1 // loop_exit
      _
    %833 = vsyncpa [#allocation7], 1
    %s834 = scalar_lea.sflag [#allocation7], 1
    %835 = vsyncpa %s834, 1

</llo_original>
